<compile_context>
chip_gen: v7x
topology: tpu7x:2x2x1
jax: 0.10.0
libtpu: 0.0.40
codegen_flags: <defaults>
</compile_context>

<pallas_src>
import jax
import jax.numpy as jnp
import numpy as np
from jax.experimental import pallas as pl
from jax.experimental.pallas import tpu as pltpu

LANE = 128
NEG = -1e30   # finite "-inf" for masking invalid conv positions before max-pool


def _make_cnn_kernel(f_max, pad):
    """Builds the packed text-CNN forward kernel.

    Refs:
      x_ref : (B, L, D)        f32  embedded sentence
      w_ref : (f_max, D, pad)  bf16 per-tap conv weights, channel-packed
      b_ref : (1, pad)         f32  packed biases (zero in pad lanes)
      m_ref : (L, pad)         f32  additive validity mask (0 valid / NEG invalid)
      o_ref : (B, pad)         f32  pooled + ReLU output slab (lane dense)
    """

    def kernel(x_ref, w_ref, b_ref, m_ref, o_ref):
        x = x_ref[...]                                   # (B, L, D) f32
        B, L, D = x.shape
        n = B * L
        # Single bf16 cast of the LHS, hoisted out of the tap loop (f32 accumulate).
        x2d = x.reshape(n, D).astype(jnp.bfloat16)       # (B*L, D)

        # f_max lane-dense matmuls; taps j >= f_i carry zero weight columns for
        # filter i, so summing all taps is exact for every filter at once.
        scores = None
        for j in range(f_max):
            p = jnp.dot(x2d, w_ref[j],
                        preferred_element_type=jnp.float32)      # (B*L, pad) f32
            if j:
                # Align tap j with position t: rolled[r] = p[(r + j) % n]
                # (shift = n - j  ==  jnp.roll shift of -j).  Rows that wrap
                # across a batch boundary only hit positions masked NEG below.
                p = pltpu.roll(p, shift=n - j, axis=0)
            scores = p if scores is None else scores + p

        # (B, L, pad) slab; per-filter invalid positions -> NEG, then one max
        # over the time axis (max_pool1d over all positions).
        scores = scores.reshape(B, L, pad) + m_ref[...]
        pooled = jnp.max(scores, axis=1)                 # (B, pad)

        # Bias + ReLU hoisted out of the time loop (ReLU is monotone and the
        # bias is constant over t, so relu(max_t s_t + b) == max_t relu(s_t+b)).
        o_ref[...] = jnp.maximum(pooled + b_ref[...], 0.0)

        # TODO(synk): training-mode dropout would need pltpu.prng_seed /
        # prng_random_bits; eval-mode dropout (training=False) is the identity.

    return kernel


def cnn_forward(x_emb, weights, biases, filters, filter_num):
    """x_emb: (B, L, D) f32. weights[i]: (f_i*D, C_i). biases[i]: (1, C_i)."""
    B, L, D = x_emb.shape
    out_dim = sum(filter_num)
    pad = ((out_dim + LANE - 1) // LANE) * LANE          # lane-dense output width
    f_max = max(filters)

    # ---- Pack conv params into lane-dense slabs (final-output channel order) ----
    w_packed = np.zeros((f_max, D, pad), np.float32)
    b_packed = np.zeros((1, pad), np.float32)
    m_packed = np.zeros((L, pad), np.float32)
    off = 0
    for f, c, w, b in zip(filters, filter_num, weights, biases):
        w_packed[:f, :, off:off + c] = np.asarray(w, np.float32).reshape(f, D, c)
        b_packed[0, off:off + c] = np.asarray(b, np.float32).reshape(c)
        m_packed[L - f + 1:, off:off + c] = NEG          # positions t >= T_i invalid
        off += c

    w_packed = jnp.asarray(w_packed, dtype=jnp.bfloat16)   # bf16 MXU operand
    b_packed = jnp.asarray(b_packed)
    m_packed = jnp.asarray(m_packed)

    kernel = _make_cnn_kernel(f_max, pad)

    # Single invocation, whole arrays resident in VMEM (no grid: the pipelining
    # machinery buys nothing at this size).
    # TODO(synk): at real batch sizes add a "parallel" batch grid axis (block
    # x_emb/out over B; shards across the two TensorCores on v7x) and size the
    # x_emb tile per generation against scoped VMEM (halve the v6e tile on v7x,
    # set vmem_limit_bytes if above the scoped default).
    out_padded = pl.pallas_call(
        kernel,
        out_shape=jax.ShapeDtypeStruct((B, pad), jnp.float32),
        in_specs=[pl.BlockSpec(memory_space=pltpu.MemorySpace.VMEM)] * 4,
        out_specs=pl.BlockSpec(memory_space=pltpu.MemorySpace.VMEM),
    )(x_emb, w_packed, b_packed, m_packed)

    return out_padded[:, :out_dim]


def reference_forward(x_emb, weights, biases, filters, filter_num):
    """Pure-JAX f32 reference of the same math (conv-as-matmul, relu, max-pool)."""
    B, L, D = x_emb.shape
    pieces = []
    for f, c, w, b in zip(filters, filter_num, weights, biases):
        scores = []
        for t in range(L - f + 1):
            window = x_emb[:, t:t + f, :].reshape(B, f * D)
            scores.append(window @ w + b)
        s = jnp.stack(scores, axis=1)                    # (B, T, C)
        pieces.append(jnp.max(jax.nn.relu(s), axis=1))
    return jnp.concatenate(pieces, axis=1)


if __name__ == "__main__":
    # ---- config (model='rand', in_channel=1, inference mode) ----
    batch_size = 2
    max_sent_len = 8        # multiple of 8 keeps the (B*L, D) merge layout-free
    word_dim = 32
    vocab_size = 20
    filters = [2, 3, 4]
    filter_num = [8, 8, 16]
    # class_size / self.fc are defined in __init__ but never used by forward();
    # dropout_prob is irrelevant in eval mode.

    key = jax.random.PRNGKey(0)
    k_emb, k_inp, *k_params = jax.random.split(key, 2 + len(filters))

    # Embedding table: (vocab_size + 2, word_dim); padding_idx row = 0.
    emb_table = jax.random.normal(
        k_emb, (vocab_size + 2, word_dim), dtype=jnp.float32) * 0.1
    emb_table = emb_table.at[vocab_size + 1].set(0.0)

    # Token ids (B, L); include the padding token to exercise padding_idx.
    inp = jax.random.randint(k_inp, (batch_size, max_sent_len), 0, vocab_size)
    inp = inp.at[0, -1].set(vocab_size + 1)

    # Conv parameters, deterministic init (fan-in scaled uniform like PyTorch).
    weights, biases = [], []
    for i, f in enumerate(filters):
        kw, kb = jax.random.split(k_params[i])
        fan_in = f * word_dim
        bound = 1.0 / np.sqrt(fan_in)
        weights.append(jax.random.uniform(
            kw, (fan_in, filter_num[i]), jnp.float32, -bound, bound))
        biases.append(jax.random.uniform(
            kb, (1, filter_num[i]), jnp.float32, -bound, bound))

    # Embedding lookup kept as plain-JAX glue.
    # TODO(synk): fuse the gather into the kernel (PrefetchScalarGridSpec token
    # ids + pl.Element row gather from an HBM-resident table) to drop the extra
    # HBM round trip at production B*L.
    x_emb = emb_table[inp]                               # (B, L, D) float32

    out = jax.block_until_ready(
        cnn_forward(x_emb, weights, biases, filters, filter_num))
    ref = reference_forward(x_emb, weights, biases, filters, filter_num)

    # bf16 MXU operands (f32 accumulate) => compare against the f32 reference
    # with a correspondingly loosened tolerance.
    np.testing.assert_allclose(np.asarray(out), np.asarray(ref),
                               rtol=2e-2, atol=2e-2)

    print("KERNEL_OK")
</pallas_src>

<mosaic_0001>
module attributes {stable_mosaic.version = 11 : i64} {
  func.func @kernel(%arg0: memref<2x8x32xf32, #tpu.memory_space<vmem>>, %arg1: memref<4x32x128xbf16, #tpu.memory_space<vmem>>, %arg2: memref<1x128xf32, #tpu.memory_space<vmem>>, %arg3: memref<8x128xf32, #tpu.memory_space<vmem>>, %arg4: memref<2x128xf32, #tpu.memory_space<vmem>>) attributes {dimension_semantics = [], scalar_prefetch = 0 : i64, scratch_operands = 0 : i64, tpu.core_type = #tpu.core_type<tc>} {
    %c0 = arith.constant 0 : index
    %c0_0 = arith.constant 0 : index
    %c0_1 = arith.constant 0 : index
    %0 = vector.load %arg0[%c0, %c0_0, %c0_1] : memref<2x8x32xf32, #tpu.memory_space<vmem>>, vector<2x8x32xf32>
    %1 = vector.shape_cast %0 : vector<2x8x32xf32> to vector<16x32xf32>
    %2 = arith.truncf %1 : vector<16x32xf32> to vector<16x32xbf16>
    %c0_2 = arith.constant 0 : index
    %c0_3 = arith.constant 0 : index
    %c0_4 = arith.constant 0 : index
    %3 = vector.load %arg1[%c0_2, %c0_3, %c0_4] : memref<4x32x128xbf16, #tpu.memory_space<vmem>>, vector<1x32x128xbf16>
    %4 = vector.shape_cast %3 : vector<1x32x128xbf16> to vector<32x128xbf16>
    %cst = arith.constant dense<0.000000e+00> : vector<16x128xf32>
    %5 = tpu.matmul %2, %4, %cst {dimension_numbers = #tpu.dot_dimension_numbers<[1], [0], [0], [1], [0, 0, 1, 1], [], []>} : vector<16x32xbf16>, vector<32x128xbf16>, vector<16x128xf32> -> vector<16x128xf32>
    %c1 = arith.constant 1 : index
    %c0_5 = arith.constant 0 : index
    %c0_6 = arith.constant 0 : index
    %6 = vector.load %arg1[%c1, %c0_5, %c0_6] : memref<4x32x128xbf16, #tpu.memory_space<vmem>>, vector<1x32x128xbf16>
    %7 = vector.shape_cast %6 : vector<1x32x128xbf16> to vector<32x128xbf16>
    %cst_7 = arith.constant dense<0.000000e+00> : vector<16x128xf32>
    %8 = tpu.matmul %2, %7, %cst_7 {dimension_numbers = #tpu.dot_dimension_numbers<[1], [0], [0], [1], [0, 0, 1, 1], [], []>} : vector<16x32xbf16>, vector<32x128xbf16>, vector<16x128xf32> -> vector<16x128xf32>
    %c15_i32 = arith.constant 15 : i32
    %9 = tpu.dynamic_rotate %8 by %c15_i32 dim 0 : vector<16x128xf32>, i32 -> vector<16x128xf32>
    %10 = arith.addf %5, %9 : vector<16x128xf32>
    %c2 = arith.constant 2 : index
    %c0_8 = arith.constant 0 : index
    %c0_9 = arith.constant 0 : index
    %11 = vector.load %arg1[%c2, %c0_8, %c0_9] : memref<4x32x128xbf16, #tpu.memory_space<vmem>>, vector<1x32x128xbf16>
    %12 = vector.shape_cast %11 : vector<1x32x128xbf16> to vector<32x128xbf16>
    %cst_10 = arith.constant dense<0.000000e+00> : vector<16x128xf32>
    %13 = tpu.matmul %2, %12, %cst_10 {dimension_numbers = #tpu.dot_dimension_numbers<[1], [0], [0], [1], [0, 0, 1, 1], [], []>} : vector<16x32xbf16>, vector<32x128xbf16>, vector<16x128xf32> -> vector<16x128xf32>
    %c14_i32 = arith.constant 14 : i32
    %14 = tpu.dynamic_rotate %13 by %c14_i32 dim 0 : vector<16x128xf32>, i32 -> vector<16x128xf32>
    %15 = arith.addf %10, %14 : vector<16x128xf32>
    %c3 = arith.constant 3 : index
    %c0_11 = arith.constant 0 : index
    %c0_12 = arith.constant 0 : index
    %16 = vector.load %arg1[%c3, %c0_11, %c0_12] : memref<4x32x128xbf16, #tpu.memory_space<vmem>>, vector<1x32x128xbf16>
    %17 = vector.shape_cast %16 : vector<1x32x128xbf16> to vector<32x128xbf16>
    %cst_13 = arith.constant dense<0.000000e+00> : vector<16x128xf32>
    %18 = tpu.matmul %2, %17, %cst_13 {dimension_numbers = #tpu.dot_dimension_numbers<[1], [0], [0], [1], [0, 0, 1, 1], [], []>} : vector<16x32xbf16>, vector<32x128xbf16>, vector<16x128xf32> -> vector<16x128xf32>
    %c13_i32 = arith.constant 13 : i32
    %19 = tpu.dynamic_rotate %18 by %c13_i32 dim 0 : vector<16x128xf32>, i32 -> vector<16x128xf32>
    %20 = arith.addf %15, %19 : vector<16x128xf32>
    %21 = vector.shape_cast %20 : vector<16x128xf32> to vector<2x8x128xf32>
    %c0_14 = arith.constant 0 : index
    %c0_15 = arith.constant 0 : index
    %22 = vector.load %arg3[%c0_14, %c0_15] : memref<8x128xf32, #tpu.memory_space<vmem>>, vector<8x128xf32>
    %23 = vector.shape_cast %22 : vector<8x128xf32> to vector<1x8x128xf32>
    %24 = vector.broadcast %23 : vector<1x8x128xf32> to vector<2x8x128xf32>
    %25 = arith.addf %21, %24 : vector<2x8x128xf32>
    %cst_16 = arith.constant dense<0xFF800000> : vector<2x128xf32>
    %26 = vector.multi_reduction <maximumf>, %25, %cst_16 [1] : vector<2x8x128xf32> to vector<2x128xf32>
    %c0_17 = arith.constant 0 : index
    %c0_18 = arith.constant 0 : index
    %27 = vector.load %arg2[%c0_17, %c0_18] : memref<1x128xf32, #tpu.memory_space<vmem>>, vector<1x128xf32>
    %28 = vector.broadcast %27 : vector<1x128xf32> to vector<2x128xf32>
    %29 = arith.addf %26, %28 : vector<2x128xf32>
    %cst_19 = arith.constant 0.000000e+00 : f32
    %30 = vector.broadcast %cst_19 : f32 to vector<2x128xf32>
    %31 = arith.maximumf %29, %30 : vector<2x128xf32>
    %c0_20 = arith.constant 0 : index
    %c0_21 = arith.constant 0 : index
    %32 = vector.load %arg4[%c0_20, %c0_21] : memref<2x128xf32, #tpu.memory_space<vmem>>, vector<2x128xf32>
    tpu.vector_store %arg4[%c0_20, %c0_21], %31 {strides = array<i32>} : memref<2x128xf32, #tpu.memory_space<vmem>>, vector<2x128xf32>,
    return
  }
}

</mosaic_0001>

<llo_original>
// kernel: tpu_custom_call.1
$region0: #{tpu_custom_call.1}
  #allocation0 [shape = 'u32[]', space=smem, size = 0x4, offset = 0x4, fixed_abs, tag = 'smem constant byte address 0x4 - core index']
  #allocation1 [shape = 'u32[144,128]{1,0:T(1,128)}', space=vmem, size = 0x12000, scoped, tag = 'internal scratch']
  %s0 = inlined_call_operand.hbm [shape: f32[2,8,32], index: 0, kind: input, shape index: {}]
  %s1 = inlined_call_operand.hbm [shape: bf16[4,32,128], index: 1, kind: input, shape index: {}]
  %s2 = inlined_call_operand.vmem [shape: f32[1,128], index: 2, kind: input, shape index: {}]
  %s3 = inlined_call_operand.vmem [shape: f32[8,128], index: 3, kind: input, shape index: {}]
  %s4 = inlined_call_operand.hbm [shape: f32[2,128], index: 4, kind: output, shape index: {}]
  %s5 = sld [smem:[#allocation0]]
  $region34: #{tpu_custom_call.1} parent=0
    _
  %s7 = ssub.s32 1, %s5
  %s8 = scalar_select 0, %s7, %s5
  $region1: #{tpu_custom_call.1} parent=0
    #allocation2 [shape = 'u8[8192]{0}', space=vmem, size = 0x2000, scoped, tag = 'input window, operand 0, single buffered']
    #allocation3 [shape = 's32[1]{0}', space=sflag, size = 0x4, scoped, tag = 'scoped memory for tpu_custom_call.1']
    #allocation4 [shape = 's32[1]{0}', space=sflag, size = 0x4, scoped, tag = 'scoped memory for tpu_custom_call.1']
    #allocation5 [shape = 'u8[32768]{0}', space=vmem, size = 0x8000, scoped, tag = 'input window, operand 1, single buffered']
    #allocation6 [shape = 's32[1]{0}', space=sflag, size = 0x4, scoped, tag = 'scoped memory for tpu_custom_call.1']
    #allocation7 [shape = 'u8[1024]{0}', space=vmem, size = 0x400, scoped, tag = 'output window, operand 0, single buffered']
    %9 = vsyncpa [#allocation3], 0
    %10 = vsyncpa [#allocation6], 0
    %11 = vsyncpa [#allocation4], 0
    // Predicated region
    $region2: #{tpu_custom_call.1} parent=1 // pred_check
      _
    $region3: #{tpu_custom_call.1} parent=1 // pred_check_branch
      %13 = sbr.rel (0) target = $region5
    $region4: #{tpu_custom_call.1} parent=1 // pred_region
      %s15 = ssub.s32 256, 256
      %16 = vsyncadd [#allocation3], %s15
      %s17 = sshll.u32 [#allocation2], 4
      %s18 = int_to_ptr.vmem [resolvable:$true] %s17
      %23 = dma.hbm_to_vmem [thread:$0]  %s0, 256, %s18, [#allocation3], 128, 128, 8
    $region5: #{tpu_custom_call.1} parent=1 // pred_fallthru
      _
    // Predicated region
    $region6: #{tpu_custom_call.1} parent=1 // pred_check
      _
    $region7: #{tpu_custom_call.1} parent=1 // pred_check_branch
      %25 = sbr.rel (0) target = $region9
    $region8: #{tpu_custom_call.1} parent=1 // pred_region
      %s27 = ssub.s32 1024, 1024
      %28 = vsyncadd [#allocation6], %s27
      %s29 = sshll.u32 [#allocation5], 4
      %s30 = int_to_ptr.vmem [resolvable:$true] %s29
      %35 = dma.hbm_to_vmem [thread:$0]  %s1, 1024, %s30, [#allocation6], 64, 64, 4
    $region9: #{tpu_custom_call.1} parent=1 // pred_fallthru
      _
    // Predicated region
    $region10: #{tpu_custom_call.1} parent=1 // pred_check
      _
    $region11: #{tpu_custom_call.1} parent=1 // pred_check_branch
      %37 = sbr.rel (0) target = $region13
    $region12: #{tpu_custom_call.1} parent=1 // pred_region
      _
    $region13: #{tpu_custom_call.1} parent=1 // pred_fallthru
      _
    // Predicated region
    $region14: #{tpu_custom_call.1} parent=1 // pred_check
      _
    $region15: #{tpu_custom_call.1} parent=1 // pred_check_branch
      %39 = sbr.rel (0) target = $region17
    $region16: #{tpu_custom_call.1} parent=1 // pred_region
      _
    $region17: #{tpu_custom_call.1} parent=1 // pred_fallthru
      _
    // Predicated region
    $region18: #{tpu_custom_call.1} parent=1 // pred_check
      _
    $region19: #{tpu_custom_call.1} parent=1 // pred_check_branch
      %41 = sbr.rel (0) target = $region21
    $region20: #{tpu_custom_call.1} parent=1 // pred_region
      %42 = dma.done [#allocation3], 256
    $region21: #{tpu_custom_call.1} parent=1 // pred_fallthru
      _
    // Predicated region
    $region22: #{tpu_custom_call.1} parent=1 // pred_check
      _
    $region23: #{tpu_custom_call.1} parent=1 // pred_check_branch
      %44 = sbr.rel (0) target = $region25
    $region24: #{tpu_custom_call.1} parent=1 // pred_region
      %45 = dma.done [#allocation6], 1024
    $region25: #{tpu_custom_call.1} parent=1 // pred_fallthru
      _
    %v47 = vld [vmem:[#allocation2] sm:$0xff]
    %v48 = vld [vmem:[#allocation2 + $0x8] sm:$0xff]
    %v49 = vpack.c.bf16 %v48, %v47
    %v50 = vld [vmem:[#allocation5] sm:$0xf]
    %v51 = vld [vmem:[#allocation5 + $0x4] sm:$0xf]
    %v52 = vld [vmem:[#allocation5 + $0x8] sm:$0xf]
    %v53 = vld [vmem:[#allocation5 + $0xc] sm:$0xf]
    %s54 = scalar_lea.vmem [#allocation5], 16
    %v55 = vld [vmem:[%s54] sm:$0xf]
    %v56 = vld [vmem:[%s54 + $0x4] sm:$0xf]
    %v57 = vld [vmem:[%s54 + $0x8] sm:$0xf]
    %v58 = vld [vmem:[%s54 + $0xc] sm:$0xf]
    %v63 = vunpack.c.l.b16 %v55
    %v64 = vunpack.c.l.b16 %v56
    %v65 = vunpack.c.l.b16 %v57
    %v66 = vunpack.c.l.b16 %v58
    %v67 = vpack.c.b16 %v64, %v63
    %v68 = vpack.c.b16 %v66, %v65
    %vm71 = vcmask 261120
    %v73 = vsel %vm71, %v49, 0
    %75 = vmatprep.subr.bf16.mxu0 0
    %76 = vmatpush1.bf16.msra.mxu0 %v67
    %77 = vmatprep.subr.bf16.mxu0 0
    %78 = vmatpush1.bf16.msra.mxu0 %v68
    %79 = vmatprep.subr.bf16.mxu0 0
    %80 = vmatpush1.bf16.msra.mxu0 0
    %81 = vmatprep.subr.bf16.mxu0 0
    %82 = vmatpush1.bf16.msra.mxu0 0
    %83 = vmatprep.subr.bf16.mxu0 0
    %84 = vmatpush1.bf16.msra.mxu0 0
    %85 = vmatprep.subr.bf16.mxu0 0
    %86 = vmatpush1.bf16.msra.mxu0 0
    %87 = vmatprep.subr.bf16.mxu0 0
    %88 = vmatpush1.bf16.msra.mxu0 0
    %89 = vmatprep.subr.bf16.mxu0 0
    %90 = vmatpush1.bf16.msra.mxu0 0
    %91 = vmatprep.subr.bf16.mxu0 0
    %92 = vmatpush1.bf16.msra.mxu0 0
    %93 = vmatprep.subr.bf16.mxu0 0
    %94 = vmatpush1.bf16.msra.mxu0 0
    %95 = vmatprep.subr.bf16.mxu0 0
    %96 = vmatpush1.bf16.msra.mxu0 0
    %97 = vmatprep.subr.bf16.mxu0 0
    %98 = vmatpush1.bf16.msra.mxu0 0
    %99 = vmatprep.subr.bf16.mxu0 0
    %100 = vmatpush1.bf16.msra.mxu0 0
    %101 = vmatprep.subr.bf16.mxu0 0
    %102 = vmatpush1.bf16.msra.mxu0 0
    %103 = vmatprep.subr.bf16.mxu0 0
    %104 = vmatpush1.bf16.msra.mxu0 0
    %105 = vmatprep.subr.bf16.mxu0 0
    %106 = vmatpush1.bf16.msra.mxu0 0
    %107 = vmatprep.mubr.bf16.mxu0 0
    %108 = vmatmul.mubr.bf16.gmra.mrb[0].mxu0 %v73
    %v109 = vpop.f32.mrb[0].mxu0
    %v110 = vadd.f32 0.0, %v109
    %v111 = vpop.f32.mrb[0].mxu0
    %v112 = vpop.f32.mrb[0].mxu0
    %v113 = vadd.f32 0.0, %v112
    %v114 = vpop.f32.mrb[0].mxu0
    %115 = vdwg.mxu0
    %v116 = vrot.slane %v110, 1
    %v117 = vrot.slane %v113, 1
    %v118 = vlaneseq
    %v119 = vshrl.u32 %v118, 7
    %vm120 = vcmp.lt.s32.totalorder %v119, 7
    %v121 = vsel %vm120, %v116, %v117
    %v122 = vsel %vm120, %v117, %v116
    %v127 = vunpack.c.l.b16 %v50
    %v128 = vunpack.c.l.b16 %v51
    %v129 = vunpack.c.l.b16 %v52
    %v130 = vunpack.c.l.b16 %v53
    %v131 = vpack.c.b16 %v128, %v127
    %v132 = vpack.c.b16 %v130, %v129
    %135 = vmatprep.subr.bf16.mxu0 0
    %136 = vmatpush1.bf16.msra.mxu0 %v131
    %137 = vmatprep.subr.bf16.mxu0 0
    %138 = vmatpush1.bf16.msra.mxu0 %v132
    %139 = vmatprep.subr.bf16.mxu0 0
    %140 = vmatpush1.bf16.msra.mxu0 0
    %141 = vmatprep.subr.bf16.mxu0 0
    %142 = vmatpush1.bf16.msra.mxu0 0
    %143 = vmatprep.subr.bf16.mxu0 0
    %144 = vmatpush1.bf16.msra.mxu0 0
    %145 = vmatprep.subr.bf16.mxu0 0
    %146 = vmatpush1.bf16.msra.mxu0 0
    %147 = vmatprep.subr.bf16.mxu0 0
    %148 = vmatpush1.bf16.msra.mxu0 0
    %149 = vmatprep.subr.bf16.mxu0 0
    %150 = vmatpush1.bf16.msra.mxu0 0
    %151 = vmatprep.subr.bf16.mxu0 0
    %152 = vmatpush1.bf16.msra.mxu0 0
    %153 = vmatprep.subr.bf16.mxu0 0
    %154 = vmatpush1.bf16.msra.mxu0 0
    %155 = vmatprep.subr.bf16.mxu0 0
    %156 = vmatpush1.bf16.msra.mxu0 0
    %157 = vmatprep.subr.bf16.mxu0 0
    %158 = vmatpush1.bf16.msra.mxu0 0
    %159 = vmatprep.subr.bf16.mxu0 0
    %160 = vmatpush1.bf16.msra.mxu0 0
    %161 = vmatprep.subr.bf16.mxu0 0
    %162 = vmatpush1.bf16.msra.mxu0 0
    %163 = vmatprep.subr.bf16.mxu0 0
    %164 = vmatpush1.bf16.msra.mxu0 0
    %165 = vmatprep.subr.bf16.mxu0 0
    %166 = vmatpush1.bf16.msra.mxu0 0
    %167 = vmatprep.mubr.bf16.mxu0 0
    %168 = vmatmul.mubr.bf16.gmra.mrb[0].mxu0 %v73
    %v169 = vpop.f32.mrb[0].mxu0
    %v170 = vadd.f32 %v121, %v169
    %v171 = vpop.f32.mrb[0].mxu0
    %v172 = vpop.f32.mrb[0].mxu0
    %v173 = vadd.f32 %v122, %v172
    %v174 = vpop.f32.mrb[0].mxu0
    %175 = vdwg.mxu0
    %s176 = scalar_lea.vmem [#allocation5], 32
    %v177 = vld [vmem:[%s176] sm:$0xf]
    %v178 = vld [vmem:[%s176 + $0x4] sm:$0xf]
    %v179 = vld [vmem:[%s176 + $0x8] sm:$0xf]
    %v180 = vld [vmem:[%s176 + $0xc] sm:$0xf]
    %v185 = vunpack.c.l.b16 %v177
    %v186 = vunpack.c.l.b16 %v178
    %v187 = vunpack.c.l.b16 %v179
    %v188 = vunpack.c.l.b16 %v180
    %v189 = vpack.c.b16 %v186, %v185
    %v190 = vpack.c.b16 %v188, %v187
    %193 = vmatprep.subr.bf16.mxu0 0
    %194 = vmatpush1.bf16.msra.mxu0 %v189
    %195 = vmatprep.subr.bf16.mxu0 0
    %196 = vmatpush1.bf16.msra.mxu0 %v190
    %197 = vmatprep.subr.bf16.mxu0 0
    %198 = vmatpush1.bf16.msra.mxu0 0
    %199 = vmatprep.subr.bf16.mxu0 0
    %200 = vmatpush1.bf16.msra.mxu0 0
    %201 = vmatprep.subr.bf16.mxu0 0
    %202 = vmatpush1.bf16.msra.mxu0 0
    %203 = vmatprep.subr.bf16.mxu0 0
    %204 = vmatpush1.bf16.msra.mxu0 0
    %205 = vmatprep.subr.bf16.mxu0 0
    %206 = vmatpush1.bf16.msra.mxu0 0
    %207 = vmatprep.subr.bf16.mxu0 0
    %208 = vmatpush1.bf16.msra.mxu0 0
    %209 = vmatprep.subr.bf16.mxu0 0
    %210 = vmatpush1.bf16.msra.mxu0 0
    %211 = vmatprep.subr.bf16.mxu0 0
    %212 = vmatpush1.bf16.msra.mxu0 0
    %213 = vmatprep.subr.bf16.mxu0 0
    %214 = vmatpush1.bf16.msra.mxu0 0
    %215 = vmatprep.subr.bf16.mxu0 0
    %216 = vmatpush1.bf16.msra.mxu0 0
    %217 = vmatprep.subr.bf16.mxu0 0
    %218 = vmatpush1.bf16.msra.mxu0 0
    %219 = vmatprep.subr.bf16.mxu0 0
    %220 = vmatpush1.bf16.msra.mxu0 0
    %221 = vmatprep.subr.bf16.mxu0 0
    %222 = vmatpush1.bf16.msra.mxu0 0
    %223 = vmatprep.subr.bf16.mxu0 0
    %224 = vmatpush1.bf16.msra.mxu0 0
    %225 = vmatprep.mubr.bf16.mxu0 0
    %226 = vmatmul.mubr.bf16.gmra.mrb[0].mxu0 %v73
    %v227 = vpop.f32.mrb[0].mxu0
    %v228 = vadd.f32 0.0, %v227
    %v229 = vpop.f32.mrb[0].mxu0
    %v230 = vpop.f32.mrb[0].mxu0
    %v231 = vadd.f32 0.0, %v230
    %v232 = vpop.f32.mrb[0].mxu0
    %233 = vdwg.mxu0
    %v234 = vrot.slane %v228, 2
    %v235 = vrot.slane %v231, 2
    %vm236 = vcmp.lt.s32.totalorder %v119, 6
    %v237 = vsel %vm236, %v234, %v235
    %v238 = vsel %vm236, %v235, %v234
    %v239 = vadd.f32 %v170, %v237
    %v240 = vadd.f32 %v173, %v238
    %s241 = scalar_lea.vmem [#allocation5], 48
    %v242 = vld [vmem:[%s241] sm:$0xf]
    %v243 = vld [vmem:[%s241 + $0x4] sm:$0xf]
    %v244 = vld [vmem:[%s241 + $0x8] sm:$0xf]
    %v245 = vld [vmem:[%s241 + $0xc] sm:$0xf]
    %v250 = vunpack.c.l.b16 %v242
    %v251 = vunpack.c.l.b16 %v243
    %v252 = vunpack.c.l.b16 %v244
    %v253 = vunpack.c.l.b16 %v245
    %v254 = vpack.c.b16 %v251, %v250
    %v255 = vpack.c.b16 %v253, %v252
    %258 = vmatprep.subr.bf16.mxu0 0
    %259 = vmatpush1.bf16.msra.mxu0 %v254
    %260 = vmatprep.subr.bf16.mxu0 0
    %261 = vmatpush1.bf16.msra.mxu0 %v255
    %262 = vmatprep.subr.bf16.mxu0 0
    %263 = vmatpush1.bf16.msra.mxu0 0
    %264 = vmatprep.subr.bf16.mxu0 0
    %265 = vmatpush1.bf16.msra.mxu0 0
    %266 = vmatprep.subr.bf16.mxu0 0
    %267 = vmatpush1.bf16.msra.mxu0 0
    %268 = vmatprep.subr.bf16.mxu0 0
    %269 = vmatpush1.bf16.msra.mxu0 0
    %270 = vmatprep.subr.bf16.mxu0 0
    %271 = vmatpush1.bf16.msra.mxu0 0
    %272 = vmatprep.subr.bf16.mxu0 0
    %273 = vmatpush1.bf16.msra.mxu0 0
    %274 = vmatprep.subr.bf16.mxu0 0
    %275 = vmatpush1.bf16.msra.mxu0 0
    %276 = vmatprep.subr.bf16.mxu0 0
    %277 = vmatpush1.bf16.msra.mxu0 0
    %278 = vmatprep.subr.bf16.mxu0 0
    %279 = vmatpush1.bf16.msra.mxu0 0
    %280 = vmatprep.subr.bf16.mxu0 0
    %281 = vmatpush1.bf16.msra.mxu0 0
    %282 = vmatprep.subr.bf16.mxu0 0
    %283 = vmatpush1.bf16.msra.mxu0 0
    %284 = vmatprep.subr.bf16.mxu0 0
    %285 = vmatpush1.bf16.msra.mxu0 0
    %286 = vmatprep.subr.bf16.mxu0 0
    %287 = vmatpush1.bf16.msra.mxu0 0
    %288 = vmatprep.subr.bf16.mxu0 0
    %289 = vmatpush1.bf16.msra.mxu0 0
    %290 = vmatprep.mubr.bf16.mxu0 0
    %291 = vmatmul.mubr.bf16.gmra.mrb[0].mxu0 %v73
    %v292 = vpop.f32.mrb[0].mxu0
    %v293 = vadd.f32 0.0, %v292
    %v294 = vpop.f32.mrb[0].mxu0
    %v295 = vpop.f32.mrb[0].mxu0
    %v296 = vadd.f32 0.0, %v295
    %v297 = vpop.f32.mrb[0].mxu0
    %298 = vdwg.mxu0
    %v299 = vrot.slane %v293, 3
    %v300 = vrot.slane %v296, 3
    %vm301 = vcmp.lt.s32.totalorder %v119, 5
    %v302 = vsel %vm301, %v299, %v300
    %v303 = vsel %vm301, %v300, %v299
    %v304 = vadd.f32 %v239, %v302
    %v305 = vadd.f32 %v240, %v303
    %v306 = vld [vmem:[%s3] sm:$0xff]
    %v307 = vadd.f32 %v304, %v306
    %v308 = vadd.f32 %v305, %v306
    %v309 = vrot.slane %v307, 4
    %v310 = vmax.f32 %v307, %v309
    %v311 = vrot.slane %v310, 2
    %v312 = vmax.f32 %v310, %v311
    %v313 = vrot.slane %v312, 1
    %v314 = vmax.f32 %v312, %v313
    %v315 = vrot.slane %v308, 4
    %v316 = vmax.f32 %v308, %v315
    %v317 = vrot.slane %v316, 2
    %v318 = vmax.f32 %v316, %v317
    %v319 = vrot.slane %v318, 1
    %v320 = vmax.f32 %v318, %v319
    %v321 = vld [vmem:[%s2] sm:$0x1]
    %v323 = vlaneseq
    %v324 = vshrl.u32 %v323, 7
    %v325 = vsub.s32 0, %v324
    %v326 = vrot.slane %v321, %v325
    %v328 = vadd.f32 %v314, %v326
    %v329 = vadd.f32 %v320, %v326
    %v330 = vmax.f32 %v328, 0.0
    %v331 = vmax.f32 %v329, 0.0
    %v334 = vrot.slane %v331, 7
    %vm335 = vcmask 1041409
    %v336 = vsel %vm335, %v334, %v330
    %338 = vst [vmem:[#allocation7] sm:$0x3] %v336
    // Predicated region
    $region26: #{tpu_custom_call.1} parent=1 // pred_check
      _
    $region27: #{tpu_custom_call.1} parent=1 // pred_check_branch
      %340 = sbr.rel (0) target = $region29
    $region28: #{tpu_custom_call.1} parent=1 // pred_region
      %s342 = ssub.s32 32, 32
      %343 = vsyncadd [#allocation4], %s342
      %s345 = sshll.u32 [#allocation7], 4
      %s346 = int_to_ptr.vmem [resolvable:$true] %s345
      %348 = dma.vmem_to_hbm [thread:$0]  %s346, 32, %s4, [#allocation4]
    $region29: #{tpu_custom_call.1} parent=1 // pred_fallthru
      _
    // Predicated region
    $region30: #{tpu_custom_call.1} parent=1 // pred_check
      _
    $region31: #{tpu_custom_call.1} parent=1 // pred_check_branch
      %350 = sbr.rel (0) target = $region33
    $region32: #{tpu_custom_call.1} parent=1 // pred_region
      %351 = dma.done [#allocation4], 32
    $region33: #{tpu_custom_call.1} parent=1 // pred_fallthru
      _
    %352 = vsyncpa [#allocation3], 1
    %353 = vsyncpa [#allocation6], 1
    %354 = vsyncpa [#allocation4], 1

</llo_original>
